<compile_context>
chip_gen: v5e
topology: v5e:2x2
jax: 0.10.0
libtpu: 0.0.40
codegen_flags: <defaults>
</compile_context>

<pallas_src>
import numpy as np
import jax
import jax.numpy as jnp
from jax.experimental import pallas as pl
from jax.experimental.pallas import tpu as pltpu


def maddpg_value_kernel(x_ref, w1_ref, b1_ref, w2_ref, b2_ref,
                        w3_ref, b3_ref, out_ref):
    # In-kernel cast of the activation tile to the MXU operand dtype.
    # (No-op for the f32 path; avoids a separate wrapper-side cast pass over x.)
    x = x_ref[...].astype(w1_ref.dtype)

    # fc1 + ReLU  (MXU dot, f32 accumulate; bias/ReLU on the VPU in f32)
    h1 = jnp.dot(x, w1_ref[...],
                 preferred_element_type=jnp.float32) + b1_ref[...]
    h1 = jnp.maximum(h1, 0.0)

    # fc2 + ReLU  (cast MXU operand back to the weight dtype; accumulate f32)
    h1 = h1.astype(w2_ref.dtype)
    h2 = jnp.dot(h1, w2_ref[...],
                 preferred_element_type=jnp.float32) + b2_ref[...]
    h2 = jnp.maximum(h2, 0.0)

    # fc3 (N=1 head): VPU multiply + lane-sum reduction (keeps the MXU free),
    # stored lane-dense as a (1, b_tile) row -> full unmasked vector stores.
    val = jnp.sum(h2 * w3_ref[...], axis=-1) + b3_ref[0, 0]   # (b_tile,)
    out_ref[...] = val.reshape(1, -1).astype(out_ref.dtype)   # (1, b_tile)


def _round_up(n, m):
    return ((n + m - 1) // m) * m


_B_TILE_MAX = 1024   # bounded by the f32 (b_tile, 640) h2 temporaries in VMEM


def maddpg_value_forward(x, params, *, compute_dtype=jnp.float32, b_tile=None):
    """x: (B, state_size + action_size). Returns (B, 1) f32.

    On v6e/v7x pass compute_dtype=jnp.bfloat16 for bf16 MXU operands
    (accumulation and the epilogue stay f32); keep f32 on v5e.
    """
    w1, b1, w2, b2, w3_row, b3 = params
    B, in_dim = x.shape
    H1 = w1.shape[1]
    H2 = w2.shape[1]

    # Sublane alignment of the x tile is set by x's storage dtype.
    align = max(8, 32 // jnp.dtype(x.dtype).itemsize)
    if b_tile is None:
        if B > 2 * _B_TILE_MAX:
            b_tile = _B_TILE_MAX                         # many full-size tiles
        elif B > _B_TILE_MAX:
            b_tile = _round_up(pl.cdiv(B, 2), 128)       # 2 tiles -> both v7x TCs busy
        else:
            b_tile = _round_up(B, align)                 # single tile, small batch
    num_tiles = pl.cdiv(B, b_tile)
    B_pad = num_tiles * b_tile
    if num_tiles > 1:
        # Lane-dense output blocks need a 128-multiple tile when tiled.
        assert b_tile % 128 == 0, "b_tile must be a multiple of 128 when B > b_tile"
    else:
        assert b_tile == B or b_tile % align == 0

    # MXU operands in compute_dtype.  Weights are tiny (~165 KB) and cast once
    # here (a no-op if params are already stored in compute_dtype); the
    # activation tile is cast inside the kernel so x is read from HBM once.
    w1c = w1.astype(compute_dtype)
    w2c = w2.astype(compute_dtype)

    out_row = pl.pallas_call(
        maddpg_value_kernel,
        out_shape=jax.ShapeDtypeStruct((1, B_pad), jnp.float32),
        grid=(num_tiles,),
        in_specs=[
            pl.BlockSpec((b_tile, in_dim), lambda i: (i, 0)),    # x tile (pipelined)
            pl.BlockSpec((in_dim, H1),     lambda i: (0, 0)),    # w1 (VMEM resident)
            pl.BlockSpec((1, H1),          lambda i: (0, 0)),    # b1
            pl.BlockSpec((H1, H2),         lambda i: (0, 0)),    # w2 (VMEM resident)
            pl.BlockSpec((1, H2),          lambda i: (0, 0)),    # b2
            pl.BlockSpec((1, H2),          lambda i: (0, 0)),    # w3 row (lane-dense)
            pl.BlockSpec(memory_space=pltpu.MemorySpace.SMEM),   # b3 scalar
        ],
        out_specs=pl.BlockSpec((1, b_tile), lambda i: (0, i)),   # lane-dense output
        compiler_params=pltpu.CompilerParams(
            dimension_semantics=("parallel",),
            vmem_limit_bytes=32 * 1024 * 1024),
    )(x, w1c, b1, w2c, b2, w3_row, b3)

    # (1, B_pad) lane-dense row -> (B, 1) column; padded lanes (garbage rows
    # from the ragged last tile's OOB block read) are sliced off here.
    return out_row[0, :B].reshape(B, 1)


def init_params(key, in_dim, H1=64, H2=640):
    """Deterministic synthetic init mirroring default nn.Linear init.

    Weights are stored transposed vs. PyTorch, i.e. (in_features, out_features),
    so every Linear is `x @ W + b` inside the kernel.  fc3's weight is kept as
    a lane-dense (1, H2) row for the VPU value head; fc3's bias is a (1, 1)
    scalar placed in SMEM.
    """
    ks = jax.random.split(key, 6)

    def u(k, shape, r):
        return jax.random.uniform(k, shape, jnp.float32, minval=-r, maxval=r)

    w1 = u(ks[0], (in_dim, H1), 1.0 / np.sqrt(in_dim))
    b1 = u(ks[1], (1, H1),      1.0 / np.sqrt(in_dim))
    w2 = u(ks[2], (H1, H2),     1.0 / np.sqrt(H1))
    b2 = u(ks[3], (1, H2),      1.0 / np.sqrt(H1))
    w3 = u(ks[4], (1, H2),      1.0 / np.sqrt(H2))   # fc3.weight is (1, H2)
    b3 = u(ks[5], (1, 1),       1.0 / np.sqrt(H2))
    return (w1, b1, w2, b2, w3, b3)


def reference_forward(x, params, compute_dtype=jnp.float32):
    """Pure-JAX reference mirroring the kernel's dtype handling."""
    w1, b1, w2, b2, w3_row, b3 = params
    xc = x.astype(compute_dtype)
    h1 = jnp.dot(xc, w1.astype(compute_dtype),
                 preferred_element_type=jnp.float32) + b1
    h1 = jnp.maximum(h1, 0.0).astype(compute_dtype)
    h2 = jnp.dot(h1, w2.astype(compute_dtype),
                 preferred_element_type=jnp.float32) + b2
    h2 = jnp.maximum(h2, 0.0)
    return jnp.sum(h2 * w3_row, axis=-1, keepdims=True) + b3


if __name__ == "__main__":
    state_size, action_size = 16, 4
    H1, H2 = 64, 640                      # module defaults
    in_dim = state_size + action_size

    key = jax.random.PRNGKey(0)
    k_small, k_mid, k_big, k_p = jax.random.split(key, 4)
    params = init_params(k_p, in_dim, H1, H2)

    # Small single-tile batch (f32 path).
    x_small = jax.random.normal(k_small, (8, in_dim), jnp.float32)
    out = jax.block_until_ready(maddpg_value_forward(x_small, params))
    ref = reference_forward(x_small, params)
    np.testing.assert_allclose(np.asarray(out), np.asarray(ref),
                               rtol=1e-5, atol=1e-5)
    assert out.shape == (8, 1)

    # Multi-tile batch with a ragged last tile (no wrapper-side pad), f32.
    x_mid = jax.random.normal(k_mid, (300, in_dim), jnp.float32)
    out_mid = jax.block_until_ready(
        maddpg_value_forward(x_mid, params, b_tile=128))
    ref_mid = reference_forward(x_mid, params)
    np.testing.assert_allclose(np.asarray(out_mid), np.asarray(ref_mid),
                               rtol=1e-5, atol=1e-5)

    # Default large-tile path: b_tile=1024, 3 grid steps, ragged last tile.
    x_big = jax.random.normal(k_big, (2500, in_dim), jnp.float32)
    out_big = jax.block_until_ready(maddpg_value_forward(x_big, params))
    ref_big = reference_forward(x_big, params)
    np.testing.assert_allclose(np.asarray(out_big), np.asarray(ref_big),
                               rtol=1e-5, atol=1e-5)

    # bf16 MXU-operand path (v6e/v7x): activations cast in-kernel,
    # f32 accumulation and epilogue.
    out_bf16 = jax.block_until_ready(
        maddpg_value_forward(x_big, params, compute_dtype=jnp.bfloat16))
    ref_bf16 = reference_forward(x_big, params, jnp.bfloat16)
    np.testing.assert_allclose(np.asarray(out_bf16), np.asarray(ref_bf16),
                               rtol=5e-3, atol=5e-3)

    print("KERNEL_OK")
</pallas_src>

<mosaic_0001>
module attributes {stable_mosaic.version = 11 : i64} {
  func.func @maddpg_value_kernel(%arg0: i32, %arg1: memref<8x20xf32, #tpu.memory_space<vmem>>, %arg2: memref<20x64xf32, #tpu.memory_space<vmem>>, %arg3: memref<1x64xf32, #tpu.memory_space<vmem>>, %arg4: memref<64x640xf32, #tpu.memory_space<vmem>>, %arg5: memref<1x640xf32, #tpu.memory_space<vmem>>, %arg6: memref<1x640xf32, #tpu.memory_space<vmem>>, %arg7: memref<1x1xf32, #tpu.memory_space<smem>>, %arg8: memref<1x8xf32, #tpu.memory_space<vmem>>) attributes {dimension_semantics = [#tpu.dimension_semantics<parallel>], iteration_bounds = array<i64: 1>, scalar_prefetch = 0 : i64, scratch_operands = 0 : i64, tpu.core_type = #tpu.core_type<tc>, window_params = [{transform_indices = @transform_0, window_bounds = array<i64: 8, 20>}, {pipeline_mode = #tpu.pipeline_mode<synchronous>, transform_indices = @transform_1, window_bounds = array<i64: 20, 64>}, {pipeline_mode = #tpu.pipeline_mode<synchronous>, transform_indices = @transform_2, window_bounds = array<i64: 1, 64>}, {pipeline_mode = #tpu.pipeline_mode<synchronous>, transform_indices = @transform_3, window_bounds = array<i64: 64, 640>}, {pipeline_mode = #tpu.pipeline_mode<synchronous>, transform_indices = @transform_4, window_bounds = array<i64: 1, 640>}, {pipeline_mode = #tpu.pipeline_mode<synchronous>, transform_indices = @transform_5, window_bounds = array<i64: 1, 640>}, {transform_indices = @transform_6, window_bounds = array<i64: 1, 1>}, {transform_indices = @transform_7, window_bounds = array<i64: 1, 8>}]} {
    %c0 = arith.constant 0 : index
    %c0_0 = arith.constant 0 : index
    %0 = vector.load %arg1[%c0, %c0_0] : memref<8x20xf32, #tpu.memory_space<vmem>>, vector<8x20xf32>
    %c0_1 = arith.constant 0 : index
    %c0_2 = arith.constant 0 : index
    %1 = vector.load %arg2[%c0_1, %c0_2] : memref<20x64xf32, #tpu.memory_space<vmem>>, vector<20x64xf32>
    %cst = arith.constant dense<0.000000e+00> : vector<8x64xf32>
    %2 = tpu.matmul %0, %1, %cst {dimension_numbers = #tpu.dot_dimension_numbers<[1], [0], [0], [1], [0, 0, 1, 1], [], []>} : vector<8x20xf32>, vector<20x64xf32>, vector<8x64xf32> -> vector<8x64xf32>
    %c0_3 = arith.constant 0 : index
    %c0_4 = arith.constant 0 : index
    %3 = vector.load %arg3[%c0_3, %c0_4] : memref<1x64xf32, #tpu.memory_space<vmem>>, vector<1x64xf32>
    %4 = vector.broadcast %3 : vector<1x64xf32> to vector<8x64xf32>
    %5 = arith.addf %2, %4 : vector<8x64xf32>
    %cst_5 = arith.constant 0.000000e+00 : f32
    %6 = vector.broadcast %cst_5 : f32 to vector<8x64xf32>
    %7 = arith.maximumf %5, %6 : vector<8x64xf32>
    %c0_6 = arith.constant 0 : index
    %c0_7 = arith.constant 0 : index
    %8 = vector.load %arg4[%c0_6, %c0_7] : memref<64x640xf32, #tpu.memory_space<vmem>>, vector<64x640xf32>
    %cst_8 = arith.constant dense<0.000000e+00> : vector<8x640xf32>
    %9 = tpu.matmul %7, %8, %cst_8 {dimension_numbers = #tpu.dot_dimension_numbers<[1], [0], [0], [1], [0, 0, 1, 1], [], []>} : vector<8x64xf32>, vector<64x640xf32>, vector<8x640xf32> -> vector<8x640xf32>
    %c0_9 = arith.constant 0 : index
    %c0_10 = arith.constant 0 : index
    %10 = vector.load %arg5[%c0_9, %c0_10] : memref<1x640xf32, #tpu.memory_space<vmem>>, vector<1x640xf32>
    %11 = vector.broadcast %10 : vector<1x640xf32> to vector<8x640xf32>
    %12 = arith.addf %9, %11 : vector<8x640xf32>
    %cst_11 = arith.constant 0.000000e+00 : f32
    %13 = vector.broadcast %cst_11 : f32 to vector<8x640xf32>
    %14 = arith.maximumf %12, %13 : vector<8x640xf32>
    %c0_12 = arith.constant 0 : index
    %c0_13 = arith.constant 0 : index
    %15 = vector.load %arg6[%c0_12, %c0_13] : memref<1x640xf32, #tpu.memory_space<vmem>>, vector<1x640xf32>
    %16 = vector.broadcast %15 : vector<1x640xf32> to vector<8x640xf32>
    %17 = arith.mulf %14, %16 : vector<8x640xf32>
    %cst_14 = arith.constant dense<0.000000e+00> : vector<8xf32>
    %18 = vector.multi_reduction <add>, %17, %cst_14 [1] : vector<8x640xf32> to vector<8xf32>
    %c0_15 = arith.constant 0 : index
    %c0_16 = arith.constant 0 : index
    %19 = memref.load %arg7[%c0_15, %c0_16] : memref<1x1xf32, #tpu.memory_space<smem>>
    %20 = vector.broadcast %19 : f32 to vector<8xf32>
    %21 = arith.addf %18, %20 : vector<8xf32>
    %22 = vector.shape_cast %21 : vector<8xf32> to vector<1x8xf32>
    %c0_17 = arith.constant 0 : index
    %c0_18 = arith.constant 0 : index
    %23 = vector.load %arg8[%c0_17, %c0_18] : memref<1x8xf32, #tpu.memory_space<vmem>>, vector<1x8xf32>
    tpu.vector_store %arg8[%c0_17, %c0_18], %22 {strides = array<i32>} : memref<1x8xf32, #tpu.memory_space<vmem>>, vector<1x8xf32>,
    return
  }
  func.func @transform_0(%arg0: i32) -> (i32, i32) {
    %c0_i32 = arith.constant 0 : i32
    %c0_i32_0 = arith.constant 0 : i32
    return %arg0, %c0_i32 : i32, i32
  }
  func.func @transform_1(%arg0: i32) -> (i32, i32) {
    %c0_i32 = arith.constant 0 : i32
    %c0_i32_0 = arith.constant 0 : i32
    %c0_i32_1 = arith.constant 0 : i32
    return %c0_i32, %c0_i32_0 : i32, i32
  }
  func.func @transform_2(%arg0: i32) -> (i32, i32) {
    %c0_i32 = arith.constant 0 : i32
    %c0_i32_0 = arith.constant 0 : i32
    %c0_i32_1 = arith.constant 0 : i32
    return %c0_i32, %c0_i32_0 : i32, i32
  }
  func.func @transform_3(%arg0: i32) -> (i32, i32) {
    %c0_i32 = arith.constant 0 : i32
    %c0_i32_0 = arith.constant 0 : i32
    %c0_i32_1 = arith.constant 0 : i32
    return %c0_i32, %c0_i32_0 : i32, i32
  }
  func.func @transform_4(%arg0: i32) -> (i32, i32) {
    %c0_i32 = arith.constant 0 : i32
    %c0_i32_0 = arith.constant 0 : i32
    %c0_i32_1 = arith.constant 0 : i32
    return %c0_i32, %c0_i32_0 : i32, i32
  }
  func.func @transform_5(%arg0: i32) -> (i32, i32) {
    %c0_i32 = arith.constant 0 : i32
    %c0_i32_0 = arith.constant 0 : i32
    %c0_i32_1 = arith.constant 0 : i32
    return %c0_i32, %c0_i32_0 : i32, i32
  }
  func.func @transform_6(%arg0: i32) -> (i32, i32) {
    %c0_i32 = arith.constant 0 : i32
    %c0_i32_0 = arith.constant 0 : i32
    %c0_i32_1 = arith.constant 0 : i32
    return %c0_i32, %c0_i32_0 : i32, i32
  }
  func.func @transform_7(%arg0: i32) -> (i32, i32) {
    %c0_i32 = arith.constant 0 : i32
    %c0_i32_0 = arith.constant 0 : i32
    return %c0_i32, %arg0 : i32, i32
  }
}

</mosaic_0001>

<llo_original>
// kernel: tpu_custom_call.1
$region0: #{tpu_custom_call.1}
  #allocation0 [shape = 'u32[]', space=smem, size = 0x4, offset = 0x4, fixed_abs, tag = 'smem constant byte address 0x4 - core index']
  #allocation1 [shape = 'u32[72,128]{1,0:T(1,128)}', space=vmem, size = 0x9000, scoped, tag = 'internal scratch']
  #allocation2 [shape = 'f32[1,1]{1,0:T(1,128)S(6)}', space=smem, size = 0x200, scoped, tag = 'scoped memory for tpu_custom_call.1']
  %s0 = inlined_call_operand.hbm [shape: f32[8,20], index: 0, kind: input, shape index: {}]
  %s1 = inlined_call_operand.hbm [shape: f32[20,64], index: 1, kind: input, shape index: {}]
  %s2 = inlined_call_operand.hbm [shape: f32[1,64], index: 2, kind: input, shape index: {}]
  %s3 = inlined_call_operand.hbm [shape: f32[64,640], index: 3, kind: input, shape index: {}]
  %s4 = inlined_call_operand.vmem [shape: f32[1,640], index: 4, kind: input, shape index: {}]
  %s5 = inlined_call_operand.hbm [shape: f32[1,640], index: 5, kind: input, shape index: {}]
  %s6 = inlined_call_operand.<no memory space> [shape: f32[1,1], index: 6, kind: input, shape index: {}]
  %s7 = inlined_call_operand.hbm [shape: f32[1,8], index: 7, kind: output, shape index: {}]
  %s8 = sld [smem:[#allocation0]]
  $region58: #{tpu_custom_call.1} parent=0
    _
  %s10 = ssub.s32 1, %s8
  %s11 = scalar_select 0, %s10, %s8
  %12 = sst [smem:[#allocation2]] %s6
  $region1: #{tpu_custom_call.1} parent=0
    #allocation3 [shape = 'u8[4096]{0}', space=vmem, size = 0x1000, scoped, tag = 'input window, operand 0, single buffered']
    #allocation4 [shape = 's32[1]{0}', space=sflag, size = 0x4, scoped, tag = 'scoped memory for tpu_custom_call.1']
    #allocation5 [shape = 's32[1]{0}', space=sflag, size = 0x4, scoped, tag = 'scoped memory for tpu_custom_call.1']
    #allocation6 [shape = 'u8[12288]{0}', space=vmem, size = 0x3000, scoped, tag = 'input window, operand 1, single buffered']
    #allocation7 [shape = 's32[1]{0}', space=sflag, size = 0x4, scoped, tag = 'scoped memory for tpu_custom_call.1']
    #allocation8 [shape = 'u8[512]{0}', space=vmem, size = 0x400, scoped, tag = 'input window, operand 2, single buffered']
    #allocation9 [shape = 'u8[163840]{0}', space=vmem, size = 0x28000, scoped, tag = 'input window, operand 3, single buffered']
    #allocation10 [shape = 's32[1]{0}', space=sflag, size = 0x4, scoped, tag = 'scoped memory for tpu_custom_call.1']
    #allocation11 [shape = 'u8[2560]{0}', space=vmem, size = 0xc00, scoped, tag = 'input window, operand 5, single buffered']
    #allocation12 [shape = 'u8[512]{0}', space=vmem, size = 0x400, scoped, tag = 'output window, operand 0, single buffered']
    %13 = vsyncpa [#allocation4], 0
    %14 = vsyncpa [#allocation7], 0
    %15 = vsyncpa [#allocation10], 0
    %16 = vsyncpa [#allocation5], 0
    // Predicated region
    $region2: #{tpu_custom_call.1} parent=1 // pred_check
      _
    $region3: #{tpu_custom_call.1} parent=1 // pred_check_branch
      %18 = sbr.rel (0) target = $region5
    $region4: #{tpu_custom_call.1} parent=1 // pred_region
      %20 = vsyncadd [#allocation4], 0
      %s22 = sshll.u32 %s0, 4
      %s23 = int_to_ptr.hbm [resolvable:$true] %s22
      %s24 = sshll.u32 [#allocation3], 4
      %s25 = int_to_ptr.vmem [resolvable:$true] %s24
      %27 = dma.hbm_to_vmem [thread:$0]  %s23, 128, %s25, [#allocation4]
    $region5: #{tpu_custom_call.1} parent=1 // pred_fallthru
      _
    // Predicated region
    $region6: #{tpu_custom_call.1} parent=1 // pred_check
      _
    $region7: #{tpu_custom_call.1} parent=1 // pred_check_branch
      %29 = sbr.rel (0) target = $region9
    $region8: #{tpu_custom_call.1} parent=1 // pred_region
      %31 = vsyncadd [#allocation7], 0
      %s32 = sshll.u32 %s1, 4
      %s33 = int_to_ptr.hbm [resolvable:$true] %s32
      %s34 = sshll.u32 [#allocation6], 4
      %s35 = int_to_ptr.vmem [resolvable:$true] %s34
      %40 = dma.hbm_to_vmem [thread:$0]  %s33, 384, %s35, [#allocation7], 128, 128, 8
    $region9: #{tpu_custom_call.1} parent=1 // pred_fallthru
      _
    // Predicated region
    $region10: #{tpu_custom_call.1} parent=1 // pred_check
      _
    $region11: #{tpu_custom_call.1} parent=1 // pred_check_branch
      %42 = sbr.rel (0) target = $region13
    $region12: #{tpu_custom_call.1} parent=1 // pred_region
      %44 = vsyncadd [#allocation7], 0
      %s46 = sshll.u32 %s2, 4
      %s47 = int_to_ptr.hbm [resolvable:$true] %s46
      %s48 = sshll.u32 [#allocation8], 4
      %s49 = int_to_ptr.vmem [resolvable:$true] %s48
      %51 = dma.hbm_to_vmem [thread:$0]  %s47, 16, %s49, [#allocation7]
    $region13: #{tpu_custom_call.1} parent=1 // pred_fallthru
      _
    // Predicated region
    $region14: #{tpu_custom_call.1} parent=1 // pred_check
      _
    $region15: #{tpu_custom_call.1} parent=1 // pred_check_branch
      %53 = sbr.rel (0) target = $region17
    $region16: #{tpu_custom_call.1} parent=1 // pred_region
      %55 = vsyncadd [#allocation10], 0
      %s56 = sshll.u32 %s3, 4
      %s57 = int_to_ptr.hbm [resolvable:$true] %s56
      %s58 = sshll.u32 [#allocation9], 4
      %s59 = int_to_ptr.vmem [resolvable:$true] %s58
      %64 = dma.hbm_to_vmem [thread:$0]  %s57, 5120, %s59, [#allocation10], 640, 640, 40
    $region17: #{tpu_custom_call.1} parent=1 // pred_fallthru
      _
    // Predicated region
    $region18: #{tpu_custom_call.1} parent=1 // pred_check
      _
    $region19: #{tpu_custom_call.1} parent=1 // pred_check_branch
      %66 = sbr.rel (0) target = $region21
    $region20: #{tpu_custom_call.1} parent=1 // pred_region
      _
    $region21: #{tpu_custom_call.1} parent=1 // pred_fallthru
      _
    // Predicated region
    $region22: #{tpu_custom_call.1} parent=1 // pred_check
      _
    $region23: #{tpu_custom_call.1} parent=1 // pred_check_branch
      %68 = sbr.rel (0) target = $region25
    $region24: #{tpu_custom_call.1} parent=1 // pred_region
      %70 = vsyncadd [#allocation10], 0
      %s72 = sshll.u32 %s5, 4
      %s73 = int_to_ptr.hbm [resolvable:$true] %s72
      %s74 = sshll.u32 [#allocation11], 4
      %s75 = int_to_ptr.vmem [resolvable:$true] %s74
      %77 = dma.hbm_to_vmem [thread:$0]  %s73, 80, %s75, [#allocation10]
    $region25: #{tpu_custom_call.1} parent=1 // pred_fallthru
      _
    // Predicated region
    $region26: #{tpu_custom_call.1} parent=1 // pred_check
      _
    $region27: #{tpu_custom_call.1} parent=1 // pred_check_branch
      %79 = sbr.rel (0) target = $region29
    $region28: #{tpu_custom_call.1} parent=1 // pred_region
      _
    $region29: #{tpu_custom_call.1} parent=1 // pred_fallthru
      _
    // Predicated region
    $region30: #{tpu_custom_call.1} parent=1 // pred_check
      _
    $region31: #{tpu_custom_call.1} parent=1 // pred_check_branch
      %81 = sbr.rel (0) target = $region33
    $region32: #{tpu_custom_call.1} parent=1 // pred_region
      %83 = dma.done [#allocation4], 128
    $region33: #{tpu_custom_call.1} parent=1 // pred_fallthru
      _
    // Predicated region
    $region34: #{tpu_custom_call.1} parent=1 // pred_check
      _
    $region35: #{tpu_custom_call.1} parent=1 // pred_check_branch
      %85 = sbr.rel (0) target = $region37
    $region36: #{tpu_custom_call.1} parent=1 // pred_region
      %87 = dma.done [#allocation7], 384
    $region37: #{tpu_custom_call.1} parent=1 // pred_fallthru
      _
    // Predicated region
    $region38: #{tpu_custom_call.1} parent=1 // pred_check
      _
    $region39: #{tpu_custom_call.1} parent=1 // pred_check_branch
      %89 = sbr.rel (0) target = $region41
    $region40: #{tpu_custom_call.1} parent=1 // pred_region
      %91 = dma.done [#allocation7], 16
    $region41: #{tpu_custom_call.1} parent=1 // pred_fallthru
      _
    // Predicated region
    $region42: #{tpu_custom_call.1} parent=1 // pred_check
      _
    $region43: #{tpu_custom_call.1} parent=1 // pred_check_branch
      %93 = sbr.rel (0) target = $region45
    $region44: #{tpu_custom_call.1} parent=1 // pred_region
      %95 = dma.done [#allocation10], 5120
    $region45: #{tpu_custom_call.1} parent=1 // pred_fallthru
      _
    // Predicated region
    $region46: #{tpu_custom_call.1} parent=1 // pred_check
      _
    $region47: #{tpu_custom_call.1} parent=1 // pred_check_branch
      %97 = sbr.rel (0) target = $region49
    $region48: #{tpu_custom_call.1} parent=1 // pred_region
      %99 = dma.done [#allocation10], 80
    $region49: #{tpu_custom_call.1} parent=1 // pred_fallthru
      _
    %v100 = vld [vmem:[#allocation3] sm:$0xff]
    %v101 = vld [vmem:[#allocation6] sm:$0xff]
    %v102 = vld [vmem:[#allocation6 + $0x8] sm:$0xff]
    %v103 = vld [vmem:[#allocation6 + $0x10] sm:$0xf]
    %v104 = vld [vmem:[#allocation8] sm:$0x1]
    %v106 = vperm.slane %v104, 0
    %vm108 = vcmask 162816
    %v110 = vsel %vm108, %v100, 0
    %vm112 = vcmask 1043456
    %v114 = vsel %vm112, %v103, 0
    %116 = vmatpush.msra.mxu0 0.0
    %117 = vmatpush.msra.mxu0 0.0
    %118 = vmatpush.msra.mxu0 0.0
    %119 = vmatpush.msra.mxu0 0.0
    %120 = vmatpush.msra.mxu0 0.0
    %121 = vmatpush.msra.mxu0 0.0
    %122 = vmatpush.msra.mxu0 0.0
    %123 = vmatpush.msra.mxu0 0.0
    %124 = vmatpush.msra.mxu0 0.0
    %125 = vmatpush.msra.mxu0 0.0
    %126 = vmatpush.msra.mxu0 0.0
    %127 = vmatpush.msra.mxu0 0.0
    %128 = vmatpush.msra.mxu0 0.0
    %129 = vmatpush.msra.mxu0 %v114
    %130 = vmatpush.msra.mxu0 %v102
    %131 = vmatpush.msra.mxu0 %v101
    %132 = vmatmul.f32.gmra.mxu0 %v110
    %v133 = vpop.f32.mrf.mxu0
    %v134 = vadd.f32 %v106, %v133
    %135 = vdwg.mxu0
    %v136 = vmax.f32 %v134, 0.0
    %v137 = vld [vmem:[#allocation9] sm:$0xff]
    %v138 = vld [vmem:[#allocation9 + $0x8] sm:$0xff]
    %v139 = vld [vmem:[#allocation9 + $0x10] sm:$0xff]
    %v140 = vld [vmem:[#allocation9 + $0x18] sm:$0xff]
    %v141 = vld [vmem:[#allocation9 + $0x20] sm:$0xff]
    %v142 = vld [vmem:[#allocation9 + $0x28] sm:$0xff]
    %v143 = vld [vmem:[#allocation9 + $0x30] sm:$0xff]
    %v144 = vld [vmem:[#allocation9 + $0x38] sm:$0xff]
    %v145 = vld [vmem:[#allocation9 + $0x40] sm:$0xff]
    %v146 = vld [vmem:[#allocation9 + $0x48] sm:$0xff]
    %v147 = vld [vmem:[#allocation9 + $0x50] sm:$0xff]
    %v148 = vld [vmem:[#allocation9 + $0x58] sm:$0xff]
    %v149 = vld [vmem:[#allocation9 + $0x60] sm:$0xff]
    %v150 = vld [vmem:[#allocation9 + $0x68] sm:$0xff]
    %v151 = vld [vmem:[#allocation9 + $0x70] sm:$0xff]
    %v152 = vld [vmem:[#allocation9 + $0x78] sm:$0xff]
    %v153 = vld [vmem:[#allocation9 + $0x80] sm:$0xff]
    %v154 = vld [vmem:[#allocation9 + $0x88] sm:$0xff]
    %v155 = vld [vmem:[#allocation9 + $0x90] sm:$0xff]
    %v156 = vld [vmem:[#allocation9 + $0x98] sm:$0xff]
    %v157 = vld [vmem:[#allocation9 + $0xa0] sm:$0xff]
    %v158 = vld [vmem:[#allocation9 + $0xa8] sm:$0xff]
    %v159 = vld [vmem:[#allocation9 + $0xb0] sm:$0xff]
    %v160 = vld [vmem:[#allocation9 + $0xb8] sm:$0xff]
    %v161 = vld [vmem:[#allocation9 + $0xc0] sm:$0xff]
    %v162 = vld [vmem:[#allocation9 + $0xc8] sm:$0xff]
    %v163 = vld [vmem:[#allocation9 + $0xd0] sm:$0xff]
    %v164 = vld [vmem:[#allocation9 + $0xd8] sm:$0xff]
    %v165 = vld [vmem:[#allocation9 + $0xe0] sm:$0xff]
    %v166 = vld [vmem:[#allocation9 + $0xe8] sm:$0xff]
    %v167 = vld [vmem:[#allocation9 + $0xf0] sm:$0xff]
    %v168 = vld [vmem:[#allocation9 + $0xf8] sm:$0xff]
    %v169 = vld [vmem:[#allocation9 + $0x100] sm:$0xff]
    %v170 = vld [vmem:[#allocation9 + $0x108] sm:$0xff]
    %v171 = vld [vmem:[#allocation9 + $0x110] sm:$0xff]
    %v172 = vld [vmem:[#allocation9 + $0x118] sm:$0xff]
    %v173 = vld [vmem:[#allocation9 + $0x120] sm:$0xff]
    %v174 = vld [vmem:[#allocation9 + $0x128] sm:$0xff]
    %v175 = vld [vmem:[#allocation9 + $0x130] sm:$0xff]
    %v176 = vld [vmem:[#allocation9 + $0x138] sm:$0xff]
    %v177 = vld [vmem:[%s4] sm:$0x1f]
    %v179 = vperm.slane %v177, 0
    %v180 = vperm.slane %v177, 1
    %v181 = vperm.slane %v177, 2
    %v182 = vperm.slane %v177, 3
    %v183 = vperm.slane %v177, 4
    %vm189 = vcmask 523264
    %v191 = vsel %vm189, %v136, 0
    %193 = vmatpush.msra.mxu0 0.0
    %194 = vmatpush.msra.mxu0 0.0
    %195 = vmatpush.msra.mxu0 0.0
    %196 = vmatpush.msra.mxu0 0.0
    %197 = vmatpush.msra.mxu0 0.0
    %198 = vmatpush.msra.mxu0 0.0
    %199 = vmatpush.msra.mxu0 0.0
    %200 = vmatpush.msra.mxu0 0.0
    %201 = vmatpush.msra.mxu0 %v172
    %202 = vmatpush.msra.mxu0 %v167
    %203 = vmatpush.msra.mxu0 %v162
    %204 = vmatpush.msra.mxu0 %v157
    %205 = vmatpush.msra.mxu0 %v152
    %206 = vmatpush.msra.mxu0 %v147
    %207 = vmatpush.msra.mxu0 %v142
    %208 = vmatpush.msra.mxu0 %v137
    %209 = vmatmul.f32.gmra.mxu0 %v191
    %v210 = vpop.f32.mrf.mxu0
    %v211 = vadd.f32 %v179, %v210
    %212 = vdwg.mxu0
    %213 = vmatpush.msra.mxu0 0.0
    %214 = vmatpush.msra.mxu0 0.0
    %215 = vmatpush.msra.mxu0 0.0
    %216 = vmatpush.msra.mxu0 0.0
    %217 = vmatpush.msra.mxu0 0.0
    %218 = vmatpush.msra.mxu0 0.0
    %219 = vmatpush.msra.mxu0 0.0
    %220 = vmatpush.msra.mxu0 0.0
    %221 = vmatpush.msra.mxu0 %v173
    %222 = vmatpush.msra.mxu0 %v168
    %223 = vmatpush.msra.mxu0 %v163
    %224 = vmatpush.msra.mxu0 %v158
    %225 = vmatpush.msra.mxu0 %v153
    %226 = vmatpush.msra.mxu0 %v148
    %227 = vmatpush.msra.mxu0 %v143
    %228 = vmatpush.msra.mxu0 %v138
    %229 = vmatmul.f32.gmra.mxu0 %v191
    %v230 = vpop.f32.mrf.mxu0
    %v231 = vadd.f32 %v180, %v230
    %232 = vdwg.mxu0
    %233 = vmatpush.msra.mxu0 0.0
    %234 = vmatpush.msra.mxu0 0.0
    %235 = vmatpush.msra.mxu0 0.0
    %236 = vmatpush.msra.mxu0 0.0
    %237 = vmatpush.msra.mxu0 0.0
    %238 = vmatpush.msra.mxu0 0.0
    %239 = vmatpush.msra.mxu0 0.0
    %240 = vmatpush.msra.mxu0 0.0
    %241 = vmatpush.msra.mxu0 %v174
    %242 = vmatpush.msra.mxu0 %v169
    %243 = vmatpush.msra.mxu0 %v164
    %244 = vmatpush.msra.mxu0 %v159
    %245 = vmatpush.msra.mxu0 %v154
    %246 = vmatpush.msra.mxu0 %v149
    %247 = vmatpush.msra.mxu0 %v144
    %248 = vmatpush.msra.mxu0 %v139
    %249 = vmatmul.f32.gmra.mxu0 %v191
    %v250 = vpop.f32.mrf.mxu0
    %v251 = vadd.f32 %v181, %v250
    %252 = vdwg.mxu0
    %253 = vmatpush.msra.mxu0 0.0
    %254 = vmatpush.msra.mxu0 0.0
    %255 = vmatpush.msra.mxu0 0.0
    %256 = vmatpush.msra.mxu0 0.0
    %257 = vmatpush.msra.mxu0 0.0
    %258 = vmatpush.msra.mxu0 0.0
    %259 = vmatpush.msra.mxu0 0.0
    %260 = vmatpush.msra.mxu0 0.0
    %261 = vmatpush.msra.mxu0 %v175
    %262 = vmatpush.msra.mxu0 %v170
    %263 = vmatpush.msra.mxu0 %v165
    %264 = vmatpush.msra.mxu0 %v160
    %265 = vmatpush.msra.mxu0 %v155
    %266 = vmatpush.msra.mxu0 %v150
    %267 = vmatpush.msra.mxu0 %v145
    %268 = vmatpush.msra.mxu0 %v140
    %269 = vmatmul.f32.gmra.mxu0 %v191
    %v270 = vpop.f32.mrf.mxu0
    %v271 = vadd.f32 %v182, %v270
    %272 = vdwg.mxu0
    %273 = vmatpush.msra.mxu0 0.0
    %274 = vmatpush.msra.mxu0 0.0
    %275 = vmatpush.msra.mxu0 0.0
    %276 = vmatpush.msra.mxu0 0.0
    %277 = vmatpush.msra.mxu0 0.0
    %278 = vmatpush.msra.mxu0 0.0
    %279 = vmatpush.msra.mxu0 0.0
    %280 = vmatpush.msra.mxu0 0.0
    %281 = vmatpush.msra.mxu0 %v176
    %282 = vmatpush.msra.mxu0 %v171
    %283 = vmatpush.msra.mxu0 %v166
    %284 = vmatpush.msra.mxu0 %v161
    %285 = vmatpush.msra.mxu0 %v156
    %286 = vmatpush.msra.mxu0 %v151
    %287 = vmatpush.msra.mxu0 %v146
    %288 = vmatpush.msra.mxu0 %v141
    %289 = vmatmul.f32.gmra.mxu0 %v191
    %v290 = vpop.f32.mrf.mxu0
    %v291 = vadd.f32 %v183, %v290
    %292 = vdwg.mxu0
    %v293 = vmax.f32 %v211, 0.0
    %v294 = vmax.f32 %v231, 0.0
    %v295 = vmax.f32 %v251, 0.0
    %v296 = vmax.f32 %v271, 0.0
    %v297 = vmax.f32 %v291, 0.0
    %v298 = vld [vmem:[#allocation11] sm:$0x1f]
    %v300 = vperm.slane %v298, 0
    %v301 = vperm.slane %v298, 1
    %v302 = vperm.slane %v298, 2
    %v303 = vperm.slane %v298, 3
    %v304 = vperm.slane %v298, 4
    %v310 = vmul.f32 %v293, %v300
    %v311 = vmul.f32 %v294, %v301
    %v312 = vmul.f32 %v295, %v302
    %v313 = vmul.f32 %v296, %v303
    %v314 = vmul.f32 %v297, %v304
    %v315 = vadd.f32 %v310, %v311
    %v316 = vadd.f32 %v315, %v312
    %v317 = vadd.f32 %v316, %v313
    %v318 = vadd.f32 %v317, %v314
    %319 = vadd.xlane.f32.xlu0 %v318
    %v320 = vpop.xlane.xlu0 %319
    %s321 = sld [smem:[#allocation2]]
    %v322 = vstv %s321
    %v323 = vadd.f32 %v320, %v322
    %v325 = vlaneseq
    %v326 = vand.u32 %v325, 127
    %v327 = vperm.slane %v323, %v326
    %vm329 = vcmask 57344
    %330 = vst.msk [vmem:[#allocation12] sm:$0x1] %vm329, %v327
    // Predicated region
    $region50: #{tpu_custom_call.1} parent=1 // pred_check
      _
    $region51: #{tpu_custom_call.1} parent=1 // pred_check_branch
      %332 = sbr.rel (0) target = $region53
    $region52: #{tpu_custom_call.1} parent=1 // pred_region
      %334 = vsyncadd [#allocation5], 0
      %s336 = sshll.u32 [#allocation12], 4
      %s337 = int_to_ptr.vmem [resolvable:$true] %s336
      %s338 = sshll.u32 %s7, 4
      %s339 = int_to_ptr.hbm [resolvable:$true] %s338
      %341 = dma.vmem_to_hbm [thread:$0]  %s337, 16, %s339, [#allocation5]
    $region53: #{tpu_custom_call.1} parent=1 // pred_fallthru
      _
    // Predicated region
    $region54: #{tpu_custom_call.1} parent=1 // pred_check
      _
    $region55: #{tpu_custom_call.1} parent=1 // pred_check_branch
      %343 = sbr.rel (0) target = $region57
    $region56: #{tpu_custom_call.1} parent=1 // pred_region
      %345 = dma.done [#allocation5], 16
    $region57: #{tpu_custom_call.1} parent=1 // pred_fallthru
      _
    %346 = vsyncpa [#allocation4], 1
    %347 = vsyncpa [#allocation7], 1
    %348 = vsyncpa [#allocation10], 1
    %349 = vsyncpa [#allocation5], 1

</llo_original>
